<compile_context>
chip_gen: v6e
topology: v6e:2x2x1
jax: 0.10.0
libtpu: 0.0.40
codegen_flags: <defaults>
</compile_context>

<pallas_src>
import functools

import jax
import jax.numpy as jnp
from jax.experimental import pallas as pl
from jax.experimental.pallas import tpu as pltpu


_MASK_BIAS = 1e9  # finite; exp(x - max - ~1e9) underflows to exactly 0.0 in f32


def gat_attn_kernel(feat_ref, el_ref, er_ref, bias_ref, out_ref, *,
                    num_heads, head_dim, negative_slope, apply_relu, mean_heads):
    """Fused multi-head dense-graph attention for one (branch, dst-row-tile) grid step.

    feat_ref: (N, H*D) bf16   projected source features (branch-resident across j)
    el_ref:   (H, N)   f32    source-side logits, lane-major (branch-resident across j)
    er_ref:   (T, H)   f32    destination-side logits for this row tile
    bias_ref: (T, N)   bf16   additive mask: 0 on edges, -1e9 on non-edges
    out_ref:  (T, H*D) or (T, D) f32
    """
    feat = feat_ref[...]                                   # (N, H*D) bf16
    el = el_ref[...]                                       # (H, N)   f32
    er = er_ref[...]                                       # (T, H)   f32
    bias = bias_ref[...].astype(jnp.float32)               # (T, N)   f32

    acc = None
    for h in range(num_heads):
        # logits for head h: broadcast add, LeakyReLU, additive edge mask
        e = er[:, h:h + 1] + el[h:h + 1, :]                # (T, N)
        e = jnp.maximum(e, negative_slope * e)             # LeakyReLU (slope in (0,1))
        e = e + bias                                       # non-edges -> ~ -1e9
        # numerically-stable softmax numerator / denominator (masked entries -> 0.0)
        m = jnp.max(e, axis=1, keepdims=True)              # (T, 1)
        p = jnp.exp(e - m)                                 # (T, N) f32
        s = jnp.sum(p, axis=1, keepdims=True)              # (T, 1)
        # aggregation on the MXU in bf16 with f32 accumulation
        feat_h = feat[:, h * head_dim:(h + 1) * head_dim]  # (N, D) bf16
        agg = jnp.dot(p.astype(jnp.bfloat16), feat_h,
                      preferred_element_type=jnp.float32)  # (T, D) f32
        # normalize AFTER the matmul: (T, D) multiplies + EUP reciprocal instead of
        # dividing the (T, N) attention matrix
        rst = agg * pl.reciprocal(s, approx=True)
        if mean_heads:
            acc = rst if acc is None else acc + rst
        else:
            if apply_relu:                                 # activation=F.relu
                rst = jnp.maximum(rst, 0.0)
            # stage head h directly into its column block of the VMEM output buffer;
            # the HBM writeback is still one full lane-dense (T, H*D) block per step.
            out_ref[:, h * head_dim:(h + 1) * head_dim] = rst

    if mean_heads:
        # TODO(synk): pad/pack the classifier lane dim toward 128 for unmasked stores.
        out_ref[...] = acc * (1.0 / num_heads)             # (T, D)


def gatconv(x, W, attn_l, attn_r, adj_bias, *, negative_slope=0.2, apply_relu=True,
            mean_heads=False, tile_dst=None, vmem_limit_bytes=48 * 1024 * 1024):
    """Dense multi-head GATConv over all ensemble branches at once.

    x:        (Bx, N, F_in), Bx in {1, B}; Bx == 1 means layer-0 input shared by branches.
    W:        (B, H, F_in, D);  attn_l / attn_r: (B, H, D)
    adj_bias: (N, N) bf16 additive mask (0 on edges, -1e9 otherwise), see make_adj_bias().
    Returns   (B, N, H*D) f32 (heads flattened, lane-dense) or (B, N, D) if mean_heads.

    Precondition (same as DGL with self-loops): every destination row has >= 1 edge.
    """
    Bx, N, F_in = x.shape
    B, H, _, D = W.shape
    HD = H * D

    if tile_dst is None:
        tile_dst = N
    assert N % tile_dst == 0
    # bf16 mask tiles need sublane multiples of 16 (packed layout) unless full-extent.
    assert tile_dst == N or tile_dst % 16 == 0
    n_tiles = N // tile_dst

    # ---- branch-constant projections, hoisted out of the kernel grid (one batched
    # ---- bf16 matmul per layer; f32 accumulation). These depend only on the branch b.
    w_all = jnp.transpose(W, (0, 2, 1, 3)).reshape(B, F_in, HD)        # (B, F_in, H*D)
    w_bf = w_all.astype(jnp.bfloat16)
    if Bx == 1:
        feat = jnp.einsum("nf,bfk->bnk", x[0].astype(jnp.bfloat16), w_bf,
                          preferred_element_type=jnp.float32)          # (B, N, H*D)
    else:
        feat = jnp.einsum("bnf,bfk->bnk", x.astype(jnp.bfloat16), w_bf,
                          preferred_element_type=jnp.float32)          # (B, N, H*D)
    feat4 = feat.reshape(B, N, H, D)
    el = jnp.einsum("bnhd,bhd->bhn", feat4, attn_l)                    # (B, H, N) lane-major
    er = jnp.einsum("bnhd,bhd->bnh", feat4, attn_r)                    # (B, N, H)
    feat_bf16 = feat.astype(jnp.bfloat16)                              # kernel MXU input

    out_dim = D if mean_heads else HD

    kernel = functools.partial(
        gat_attn_kernel, num_heads=H, head_dim=D,
        negative_slope=negative_slope, apply_relu=apply_relu, mean_heads=mean_heads)

    return pl.pallas_call(
        kernel,
        out_shape=jax.ShapeDtypeStruct((B, N, out_dim), jnp.float32),
        grid=(B, n_tiles),
        in_specs=[
            # leading None = size-1 squeezed dim -> kernel refs are 2-D
            pl.BlockSpec((None, N, HD), lambda b, j: (b, 0, 0)),        # feat (bf16)
            pl.BlockSpec((None, H, N), lambda b, j: (b, 0, 0)),         # el, lane-major
            pl.BlockSpec((None, tile_dst, H), lambda b, j: (b, j, 0)),  # er row tile
            pl.BlockSpec((tile_dst, N), lambda b, j: (j, 0)),           # mask bias (bf16)
        ],
        out_specs=pl.BlockSpec((None, tile_dst, out_dim), lambda b, j: (b, j, 0)),
        compiler_params=pltpu.CompilerParams(
            dimension_semantics=("parallel", "parallel"),
            vmem_limit_bytes=vmem_limit_bytes),
    )(feat_bf16, el, er, adj_bias)


def make_adj_bias(adj):
    """Precompute the additive edge-mask bias ONCE per forward: 0 on edges, -1e9 off."""
    return ((adj - 1.0) * _MASK_BIAS).astype(jnp.bfloat16)


# ---------------- parameter init (deterministic, synthetic, branch-stacked) ----------------

def _init_layer(key, num_branches, heads, f_in, d_out):
    k1, k2, k3 = jax.random.split(key, 3)
    scale = 1.0 / jnp.sqrt(jnp.float32(f_in))
    return {
        "W": jax.random.normal(k1, (num_branches, heads, f_in, d_out), jnp.float32) * scale,
        "al": jax.random.normal(k2, (num_branches, heads, d_out), jnp.float32) * 0.1,
        "ar": jax.random.normal(k3, (num_branches, heads, d_out), jnp.float32) * 0.1,
    }


def init_gat_ens_params(key, num_branches, num_layers, in_dim, hidden_dim,
                        num_classes, heads):
    keys = jax.random.split(key, num_layers + 1)
    params = [_init_layer(keys[0], num_branches, heads[0], in_dim, hidden_dim)]
    for l in range(1, num_layers):
        params.append(_init_layer(keys[l], num_branches, heads[l],
                                  hidden_dim * heads[l - 1], hidden_dim))
    params.append(_init_layer(keys[num_layers], num_branches, heads[-1],
                              hidden_dim * heads[-2], num_classes))
    return params


# ---------------- GAT_ens forward (all branches batched into each pallas_call) ----------------

def gat_ens_forward(params, adj, x, *, tile_dst=None):
    """Mirrors GAT_ens.forward with the branch loop folded into the kernel grid.

    Returns (output, featss): output (num_branches, N, num_classes) (== torch.cat of
    per-branch unsqueezed logits), featss = per-branch list of per-layer flattened
    hidden features (== .flatten(1) outputs).
    """
    num_branches = params[0]["W"].shape[0]
    num_layers = len(params) - 1
    adj_bias = make_adj_bias(adj)                # computed once, reused by every layer
    h = x[None]                                  # (1, N, F): layer-0 input shared by branches
    middle_stacked = []
    for l in range(num_layers):
        p = params[l]
        h = gatconv(h, p["W"], p["al"], p["ar"], adj_bias,
                    apply_relu=True, mean_heads=False, tile_dst=tile_dst)    # (B, N, H*D)
        middle_stacked.append(h)                 # already head-flattened & lane-dense
    p = params[-1]
    logits = gatconv(h, p["W"], p["al"], p["ar"], adj_bias,
                     apply_relu=False, mean_heads=True, tile_dst=tile_dst)   # (B, N, C)
    featss = [[middle_stacked[l][b] for l in range(num_layers)]
              for b in range(num_branches)]
    return logits, featss


# ---------------- pure-JAX reference (for a loose numerical check) ----------------

def _gatconv_ref(x, W, al, ar, adj, *, negative_slope=0.2, apply_relu=True,
                 mean_heads=False):
    feat = jnp.einsum("nf,hfd->nhd", x, W)                  # (N, H, D)
    el = jnp.einsum("nhd,hd->nh", feat, al)                 # (N, H)
    er = jnp.einsum("nhd,hd->nh", feat, ar)                 # (N, H)
    e = er[:, None, :] + el[None, :, :]                     # (dst, src, H)
    e = jnp.where(e >= 0.0, e, negative_slope * e)
    mask = (adj > 0.0)[:, :, None]
    e = jnp.where(mask, e, -1e30)
    alpha = jax.nn.softmax(e, axis=1)
    alpha = jnp.where(mask, alpha, 0.0)
    rst = jnp.einsum("dsh,shc->dhc", alpha, feat)           # (N, H, D)
    if mean_heads:
        return rst.mean(axis=1)
    out = rst.reshape(rst.shape[0], -1)
    return jnp.maximum(out, 0.0) if apply_relu else out


def gat_ens_reference(params, adj, x):
    num_branches = params[0]["W"].shape[0]
    num_layers = len(params) - 1
    outs, featss = [], []
    for b in range(num_branches):
        h = x
        feats = []
        for l in range(num_layers):
            p = params[l]
            h = _gatconv_ref(h, p["W"][b], p["al"][b], p["ar"][b], adj, apply_relu=True)
            feats.append(h)
        p = params[-1]
        y = _gatconv_ref(h, p["W"][b], p["al"][b], p["ar"][b], adj,
                         apply_relu=False, mean_heads=True)
        outs.append(y[None])
        featss.append(feats)
    return jnp.concatenate(outs, axis=0), featss


if __name__ == "__main__":
    key = jax.random.PRNGKey(0)
    N, in_dim, hidden_dim, num_classes = 32, 8, 16, 8
    num_layers, num_branches = 2, 2
    heads = [2, 2, 2]          # len == num_layers + 1
    tile_dst = 16              # 2 destination-row tiles; use 256-512 at real sizes

    k_x, k_adj, k_p = jax.random.split(key, 3)
    x = jax.random.normal(k_x, (N, in_dim), jnp.float32)

    # random graph with guaranteed self-loops (every node has >= 1 incoming edge)
    adj = (jax.random.uniform(k_adj, (N, N)) < 0.3).astype(jnp.float32)
    adj = jnp.maximum(adj, jnp.eye(N, dtype=jnp.float32))

    params = init_gat_ens_params(k_p, num_branches, num_layers, in_dim,
                                 hidden_dim, num_classes, heads)

    output, featss = gat_ens_forward(params, adj, x, tile_dst=tile_dst)
    output = jax.block_until_ready(output)
    for feats in featss:
        for f in feats:
            jax.block_until_ready(f)

    # shape / structure checks (mirror the PyTorch module contract)
    assert output.shape == (num_branches, N, num_classes)
    assert len(featss) == num_branches and len(featss[0]) == num_layers
    assert featss[0][0].shape == (N, hidden_dim * heads[0])
    assert bool(jnp.all(jnp.isfinite(output)))

    # numerical check against the pure-JAX dense GAT reference
    # (loose tolerance: kernel uses bf16 MXU inputs and an approximate EUP reciprocal)
    ref_out, ref_featss = gat_ens_reference(params, adj, x)
    assert bool(jnp.allclose(output, ref_out, rtol=5e-2, atol=5e-2))
    for b in range(num_branches):
        for l in range(num_layers):
            assert bool(jnp.allclose(featss[b][l], ref_featss[b][l], rtol=5e-2, atol=5e-2))

    print("KERNEL_OK")
</pallas_src>

<mosaic_0001>
module attributes {stable_mosaic.version = 11 : i64} {
  func.func @gat_attn_kernel(%arg0: i32, %arg1: i32, %arg2: memref<1x32x32xbf16, #tpu.memory_space<vmem>>, %arg3: memref<1x2x32xf32, #tpu.memory_space<vmem>>, %arg4: memref<1x16x2xf32, #tpu.memory_space<vmem>>, %arg5: memref<16x32xbf16, #tpu.memory_space<vmem>>, %arg6: memref<1x16x32xf32, #tpu.memory_space<vmem>>) attributes {dimension_semantics = [#tpu.dimension_semantics<parallel>, #tpu.dimension_semantics<parallel>], iteration_bounds = array<i64: 2, 2>, scalar_prefetch = 0 : i64, scratch_operands = 0 : i64, tpu.core_type = #tpu.core_type<tc>, window_params = [{transform_indices = @transform_0, window_bounds = array<i64: 1, 32, 32>}, {transform_indices = @transform_1, window_bounds = array<i64: 1, 2, 32>}, {transform_indices = @transform_2, window_bounds = array<i64: 1, 16, 2>}, {transform_indices = @transform_3, window_bounds = array<i64: 16, 32>}, {transform_indices = @transform_4, window_bounds = array<i64: 1, 16, 32>}]} {
    %c0 = arith.constant 0 : index
    %c0_0 = arith.constant 0 : index
    %c0_1 = arith.constant 0 : index
    %0 = vector.load %arg2[%c0, %c0_0, %c0_1] : memref<1x32x32xbf16, #tpu.memory_space<vmem>>, vector<1x32x32xbf16>
    %1 = vector.shape_cast %0 : vector<1x32x32xbf16> to vector<32x32xbf16>
    %c0_2 = arith.constant 0 : index
    %c0_3 = arith.constant 0 : index
    %c0_4 = arith.constant 0 : index
    %2 = vector.load %arg3[%c0_2, %c0_3, %c0_4] : memref<1x2x32xf32, #tpu.memory_space<vmem>>, vector<1x2x32xf32>
    %3 = vector.shape_cast %2 : vector<1x2x32xf32> to vector<2x32xf32>
    %c0_5 = arith.constant 0 : index
    %c0_6 = arith.constant 0 : index
    %c0_7 = arith.constant 0 : index
    %4 = vector.load %arg4[%c0_5, %c0_6, %c0_7] : memref<1x16x2xf32, #tpu.memory_space<vmem>>, vector<1x16x2xf32>
    %5 = vector.shape_cast %4 : vector<1x16x2xf32> to vector<16x2xf32>
    %c0_8 = arith.constant 0 : index
    %c0_9 = arith.constant 0 : index
    %6 = vector.load %arg5[%c0_8, %c0_9] : memref<16x32xbf16, #tpu.memory_space<vmem>>, vector<16x32xbf16>
    %7 = arith.extf %6 : vector<16x32xbf16> to vector<16x32xf32>
    %8 = vector.extract_strided_slice %5 {offsets = [0, 0], sizes = [16, 1], strides = [1, 1]} : vector<16x2xf32> to vector<16x1xf32>
    %9 = vector.extract_strided_slice %3 {offsets = [0, 0], sizes = [1, 32], strides = [1, 1]} : vector<2x32xf32> to vector<1x32xf32>
    %10 = vector.broadcast %8 : vector<16x1xf32> to vector<16x32xf32>
    %11 = vector.broadcast %9 : vector<1x32xf32> to vector<16x32xf32>
    %12 = arith.addf %10, %11 : vector<16x32xf32>
    %cst = arith.constant 2.000000e-01 : f32
    %13 = vector.broadcast %cst : f32 to vector<16x32xf32>
    %14 = arith.mulf %13, %12 : vector<16x32xf32>
    %15 = arith.maximumf %12, %14 : vector<16x32xf32>
    %16 = arith.addf %15, %7 : vector<16x32xf32>
    %cst_10 = arith.constant dense<0xFF800000> : vector<16xf32>
    %17 = vector.multi_reduction <maximumf>, %16, %cst_10 [1] : vector<16x32xf32> to vector<16xf32>
    %18 = vector.shape_cast %17 : vector<16xf32> to vector<16x1xf32>
    %19 = vector.broadcast %18 : vector<16x1xf32> to vector<16x32xf32>
    %20 = arith.subf %16, %19 : vector<16x32xf32>
    %21 = math.exp %20 : vector<16x32xf32>
    %cst_11 = arith.constant dense<0.000000e+00> : vector<16xf32>
    %22 = vector.multi_reduction <add>, %21, %cst_11 [1] : vector<16x32xf32> to vector<16xf32>
    %23 = vector.shape_cast %22 : vector<16xf32> to vector<16x1xf32>
    %24 = vector.extract_strided_slice %1 {offsets = [0, 0], sizes = [32, 16], strides = [1, 1]} : vector<32x32xbf16> to vector<32x16xbf16>
    %25 = arith.truncf %21 : vector<16x32xf32> to vector<16x32xbf16>
    %cst_12 = arith.constant dense<0.000000e+00> : vector<16x16xf32>
    %26 = tpu.matmul %25, %24, %cst_12 {dimension_numbers = #tpu.dot_dimension_numbers<[1], [0], [0], [1], [0, 0, 1, 1], [], []>} : vector<16x32xbf16>, vector<32x16xbf16>, vector<16x16xf32> -> vector<16x16xf32>
    %27 = tpu.reciprocal %23 {approx = true} : vector<16x1xf32> -> vector<16x1xf32>
    %28 = vector.broadcast %27 : vector<16x1xf32> to vector<16x16xf32>
    %29 = arith.mulf %26, %28 : vector<16x16xf32>
    %cst_13 = arith.constant 0.000000e+00 : f32
    %30 = vector.broadcast %cst_13 : f32 to vector<16x16xf32>
    %31 = arith.maximumf %29, %30 : vector<16x16xf32>
    %c0_14 = arith.constant 0 : index
    %c0_15 = arith.constant 0 : index
    %c0_16 = arith.constant 0 : index
    %32 = vector.load %arg6[%c0_14, %c0_15, %c0_16] : memref<1x16x32xf32, #tpu.memory_space<vmem>>, vector<1x16x16xf32>
    %33 = vector.shape_cast %32 : vector<1x16x16xf32> to vector<16x16xf32>
    %34 = vector.shape_cast %31 : vector<16x16xf32> to vector<1x16x16xf32>
    tpu.vector_store %arg6[%c0_14, %c0_15, %c0_16], %34 {strides = array<i32>} : memref<1x16x32xf32, #tpu.memory_space<vmem>>, vector<1x16x16xf32>,
    %35 = vector.extract_strided_slice %5 {offsets = [0, 1], sizes = [16, 1], strides = [1, 1]} : vector<16x2xf32> to vector<16x1xf32>
    %36 = vector.extract_strided_slice %3 {offsets = [1, 0], sizes = [1, 32], strides = [1, 1]} : vector<2x32xf32> to vector<1x32xf32>
    %37 = vector.broadcast %35 : vector<16x1xf32> to vector<16x32xf32>
    %38 = vector.broadcast %36 : vector<1x32xf32> to vector<16x32xf32>
    %39 = arith.addf %37, %38 : vector<16x32xf32>
    %cst_17 = arith.constant 2.000000e-01 : f32
    %40 = vector.broadcast %cst_17 : f32 to vector<16x32xf32>
    %41 = arith.mulf %40, %39 : vector<16x32xf32>
    %42 = arith.maximumf %39, %41 : vector<16x32xf32>
    %43 = arith.addf %42, %7 : vector<16x32xf32>
    %cst_18 = arith.constant dense<0xFF800000> : vector<16xf32>
    %44 = vector.multi_reduction <maximumf>, %43, %cst_18 [1] : vector<16x32xf32> to vector<16xf32>
    %45 = vector.shape_cast %44 : vector<16xf32> to vector<16x1xf32>
    %46 = vector.broadcast %45 : vector<16x1xf32> to vector<16x32xf32>
    %47 = arith.subf %43, %46 : vector<16x32xf32>
    %48 = math.exp %47 : vector<16x32xf32>
    %cst_19 = arith.constant dense<0.000000e+00> : vector<16xf32>
    %49 = vector.multi_reduction <add>, %48, %cst_19 [1] : vector<16x32xf32> to vector<16xf32>
    %50 = vector.shape_cast %49 : vector<16xf32> to vector<16x1xf32>
    %51 = vector.extract_strided_slice %1 {offsets = [0, 16], sizes = [32, 16], strides = [1, 1]} : vector<32x32xbf16> to vector<32x16xbf16>
    %52 = arith.truncf %48 : vector<16x32xf32> to vector<16x32xbf16>
    %cst_20 = arith.constant dense<0.000000e+00> : vector<16x16xf32>
    %53 = tpu.matmul %52, %51, %cst_20 {dimension_numbers = #tpu.dot_dimension_numbers<[1], [0], [0], [1], [0, 0, 1, 1], [], []>} : vector<16x32xbf16>, vector<32x16xbf16>, vector<16x16xf32> -> vector<16x16xf32>
    %54 = tpu.reciprocal %50 {approx = true} : vector<16x1xf32> -> vector<16x1xf32>
    %55 = vector.broadcast %54 : vector<16x1xf32> to vector<16x16xf32>
    %56 = arith.mulf %53, %55 : vector<16x16xf32>
    %cst_21 = arith.constant 0.000000e+00 : f32
    %57 = vector.broadcast %cst_21 : f32 to vector<16x16xf32>
    %58 = arith.maximumf %56, %57 : vector<16x16xf32>
    %c0_22 = arith.constant 0 : index
    %c0_23 = arith.constant 0 : index
    %c16 = arith.constant 16 : index
    %59 = vector.load %arg6[%c0_22, %c0_23, %c16] : memref<1x16x32xf32, #tpu.memory_space<vmem>>, vector<1x16x16xf32>
    %60 = vector.shape_cast %59 : vector<1x16x16xf32> to vector<16x16xf32>
    %61 = vector.shape_cast %58 : vector<16x16xf32> to vector<1x16x16xf32>
    tpu.vector_store %arg6[%c0_22, %c0_23, %c16], %61 {strides = array<i32>} : memref<1x16x32xf32, #tpu.memory_space<vmem>>, vector<1x16x16xf32>,
    return
  }
  func.func @transform_0(%arg0: i32, %arg1: i32) -> (i32, i32, i32) {
    %c0_i32 = arith.constant 0 : i32
    %c0_i32_0 = arith.constant 0 : i32
    %c0_i32_1 = arith.constant 0 : i32
    return %arg0, %c0_i32, %c0_i32_0 : i32, i32, i32
  }
  func.func @transform_1(%arg0: i32, %arg1: i32) -> (i32, i32, i32) {
    %c0_i32 = arith.constant 0 : i32
    %c0_i32_0 = arith.constant 0 : i32
    %c0_i32_1 = arith.constant 0 : i32
    return %arg0, %c0_i32, %c0_i32_0 : i32, i32, i32
  }
  func.func @transform_2(%arg0: i32, %arg1: i32) -> (i32, i32, i32) {
    %c0_i32 = arith.constant 0 : i32
    %c0_i32_0 = arith.constant 0 : i32
    return %arg0, %arg1, %c0_i32 : i32, i32, i32
  }
  func.func @transform_3(%arg0: i32, %arg1: i32) -> (i32, i32) {
    %c0_i32 = arith.constant 0 : i32
    %c0_i32_0 = arith.constant 0 : i32
    return %arg1, %c0_i32 : i32, i32
  }
  func.func @transform_4(%arg0: i32, %arg1: i32) -> (i32, i32, i32) {
    %c0_i32 = arith.constant 0 : i32
    %c0_i32_0 = arith.constant 0 : i32
    return %arg0, %arg1, %c0_i32 : i32, i32, i32
  }
}

</mosaic_0001>

<llo_original>
// kernel: tpu_custom_call.1
$region0: #{tpu_custom_call.1}
  #allocation0 [shape = 'u32[]', space=smem, size = 0x4, offset = 0x4, fixed_abs, tag = 'smem constant byte address 0x4 - core index']
  #allocation1 [shape = 'u32[144,128]{1,0:T(1,128)}', space=vmem, size = 0x12000, scoped, tag = 'internal scratch']
  %s0 = inlined_call_operand.vmem [shape: bf16[2,32,32], index: 0, kind: input, shape index: {}]
  %s1 = inlined_call_operand.vmem [shape: f32[2,2,32], index: 1, kind: input, shape index: {}]
  %s2 = inlined_call_operand.vmem [shape: f32[2,32,2], index: 2, kind: input, shape index: {}]
  %s3 = inlined_call_operand.vmem [shape: bf16[32,32], index: 3, kind: input, shape index: {}]
  %s4 = inlined_call_operand.hbm [shape: f32[2,32,32], index: 4, kind: output, shape index: {}]
  %s5 = sld [smem:[#allocation0]]
  $region49: #{tpu_custom_call.1} parent=0
    _
  %s7 = ssub.s32 1, %s5
  %s8 = scalar_select 0, %s7, %s5
  $region1: #{tpu_custom_call.1} parent=0
    #allocation2 [shape = 'u8[16384]{0}', space=vmem, size = 0x4000, scoped, tag = 'output window, operand 0']
    #allocation3 [shape = 's32[2]{0}', space=sflag, size = 0x8, scoped, tag = 'scoped memory for tpu_custom_call.1']
    %9 = vsyncpa [#allocation3], 0
    %s10 = scalar_lea.sflag [#allocation3], 1
    %11 = vsyncpa %s10, 0
    loop: start=0, step=1, limit=6
    $region2: #{tpu_custom_call.1} parent=1 // loop_pre_header
      _
    $region3: #{tpu_custom_call.1} parent=1 // loop_header
      %s13 = sphi 0, %s17
      %p14 = scmp.ge.s32.totalorder %s13, 6
      %s20 = sphi 0, %s32
      %s21 = sphi 0, %s28
      %s22 = sphi 0, %s20
      %s23 = sphi 0, %s21
      %s24 = sphi 0, %s22
      %s25 = sphi 0, %s23
      %s35 = sphi 0, %s37
      %s38 = sphi 0, %s35
      %s39 = sphi 0, %s38
      %s55 = sphi 0, %s39
      %s61 = sphi 0, %s63
      %s64 = sphi 0, %s61
      %s65 = sphi 0, %s64
      %s81 = sphi 0, %s65
      %s89 = sphi 0, %s91
      %s92 = sphi 0, %s89
      %s93 = sphi 0, %s92
      %s109 = sphi 0, %s93
      %s115 = sphi 0, %s117
      %s118 = sphi 0, %s115
      %s119 = sphi 0, %s118
      %s135 = sphi 0, %s119
      %s143 = sphi 0, %s145
      %s146 = sphi 0, %s143
      %s147 = sphi 0, %s146
      %s163 = sphi 0, %s147
    $region4: #{tpu_custom_call.1} parent=1 // loop_header_branch
      %16 = sbr.rel (%p14) target = $region8
    $region5: #{tpu_custom_call.1} parent=1 // loop_body
      %s18 = ssub.s32 %s13, 1
      %s19 = ssub.s32 %s13, 2
      %s26 = sadd.s32 1, %s21
      %p27 = scmp.ge.s32.totalorder %s26, 2
      %s28 = scalar_select %p27, 0, %s26
      %s29 = sadd.s32 1, %s20
      %s30 = scalar_select %p27, %s29, %s20
      %p31 = scmp.ge.s32.totalorder %s30, 2
      %s32 = scalar_select %p31, 0, %s30
      %s33 = ssub.s32 %s20, %s32
      %p34 = scmp.eq.s32.totalorder %s33, 0
      %s36 = sadd.s32 %s35, 1
      %s37 = scalar_select %p34, %s35, %s36
      %p40 = pneg %p34
      %p41 = scmp.eq.s32.totalorder %s13, 3
      %p42 = por %p40, %p41
      %p43 = scmp.ne.s32.totalorder %s35, %s38
      %p44 = scmp.eq.s32.totalorder %s13, 0
      %p45 = por %p43, %p44
      %p46 = scmp.ne.s32.totalorder %s35, %s38
      %p47 = scmp.eq.s32.totalorder %s18, 3
      %p48 = por %p46, %p47
      %p49 = scmp.ne.s32.totalorder %s38, %s39
      %p50 = scmp.eq.s32.totalorder %s18, 0
      %p51 = por %p49, %p50
      %p52 = scmp.ne.s32.totalorder %s38, %s39
      %p53 = scmp.eq.s32.totalorder %s19, 3
      %p54 = por %p52, %p53
      %p56 = scmp.ne.s32.totalorder %s39, %s55
      %p57 = scmp.eq.s32.totalorder %s19, 0
      %p58 = por %p56, %p57
      %s59 = ssub.s32 %s20, %s32
      %p60 = scmp.eq.s32.totalorder %s59, 0
      %s62 = sadd.s32 %s61, 1
      %s63 = scalar_select %p60, %s61, %s62
      %p66 = pneg %p60
      %p67 = scmp.eq.s32.totalorder %s13, 3
      %p68 = por %p66, %p67
      %p69 = scmp.ne.s32.totalorder %s61, %s64
      %p70 = scmp.eq.s32.totalorder %s13, 0
      %p71 = por %p69, %p70
      %p72 = scmp.ne.s32.totalorder %s61, %s64
      %p73 = scmp.eq.s32.totalorder %s18, 3
      %p74 = por %p72, %p73
      %p75 = scmp.ne.s32.totalorder %s64, %s65
      %p76 = scmp.eq.s32.totalorder %s18, 0
      %p77 = por %p75, %p76
      %p78 = scmp.ne.s32.totalorder %s64, %s65
      %p79 = scmp.eq.s32.totalorder %s19, 3
      %p80 = por %p78, %p79
      %p82 = scmp.ne.s32.totalorder %s65, %s81
      %p83 = scmp.eq.s32.totalorder %s19, 0
      %p84 = por %p82, %p83
      %s85 = ssub.s32 %s20, %s32
      %s86 = ssub.s32 %s21, %s28
      %s87 = sor.u32 %s85, %s86
      %p88 = scmp.eq.s32.totalorder %s87, 0
      %s90 = sadd.s32 %s89, 1
      %s91 = scalar_select %p88, %s89, %s90
      %p94 = pneg %p88
      %p95 = scmp.eq.s32.totalorder %s13, 3
      %p96 = por %p94, %p95
      %p97 = scmp.ne.s32.totalorder %s89, %s92
      %p98 = scmp.eq.s32.totalorder %s13, 0
      %p99 = por %p97, %p98
      %p100 = scmp.ne.s32.totalorder %s89, %s92
      %p101 = scmp.eq.s32.totalorder %s18, 3
      %p102 = por %p100, %p101
      %p103 = scmp.ne.s32.totalorder %s92, %s93
      %p104 = scmp.eq.s32.totalorder %s18, 0
      %p105 = por %p103, %p104
      %p106 = scmp.ne.s32.totalorder %s92, %s93
      %p107 = scmp.eq.s32.totalorder %s19, 3
      %p108 = por %p106, %p107
      %p110 = scmp.ne.s32.totalorder %s93, %s109
      %p111 = scmp.eq.s32.totalorder %s19, 0
      %p112 = por %p110, %p111
      %s113 = ssub.s32 %s21, %s28
      %p114 = scmp.eq.s32.totalorder %s113, 0
      %s116 = sadd.s32 %s115, 1
      %s117 = scalar_select %p114, %s115, %s116
      %p120 = pneg %p114
      %p121 = scmp.eq.s32.totalorder %s13, 3
      %p122 = por %p120, %p121
      %p123 = scmp.ne.s32.totalorder %s115, %s118
      %p124 = scmp.eq.s32.totalorder %s13, 0
      %p125 = por %p123, %p124
      %p126 = scmp.ne.s32.totalorder %s115, %s118
      %p127 = scmp.eq.s32.totalorder %s18, 3
      %p128 = por %p126, %p127
      %p129 = scmp.ne.s32.totalorder %s118, %s119
      %p130 = scmp.eq.s32.totalorder %s18, 0
      %p131 = por %p129, %p130
      %p132 = scmp.ne.s32.totalorder %s118, %s119
      %p133 = scmp.eq.s32.totalorder %s19, 3
      %p134 = por %p132, %p133
      %p136 = scmp.ne.s32.totalorder %s119, %s135
      %p137 = scmp.eq.s32.totalorder %s19, 0
      %p138 = por %p136, %p137
      %s139 = ssub.s32 %s20, %s32
      %s140 = ssub.s32 %s21, %s28
      %s141 = sor.u32 %s139, %s140
      %p142 = scmp.eq.s32.totalorder %s141, 0
      %s144 = sadd.s32 %s143, 1
      %s145 = scalar_select %p142, %s143, %s144
      %p148 = pneg %p142
      %p149 = scmp.eq.s32.totalorder %s13, 3
      %p150 = por %p148, %p149
      %p151 = scmp.ne.s32.totalorder %s143, %s146
      %p152 = scmp.eq.s32.totalorder %s13, 0
      %p153 = por %p151, %p152
      %p154 = scmp.ne.s32.totalorder %s143, %s146
      %p155 = scmp.eq.s32.totalorder %s18, 3
      %p156 = por %p154, %p155
      %p157 = scmp.ne.s32.totalorder %s146, %s147
      %p158 = scmp.eq.s32.totalorder %s18, 0
      %p159 = por %p157, %p158
      %p160 = scmp.ne.s32.totalorder %s146, %s147
      %p161 = scmp.eq.s32.totalorder %s19, 3
      %p162 = por %p160, %p161
      %p164 = scmp.ne.s32.totalorder %s147, %s163
      %p165 = scmp.eq.s32.totalorder %s19, 0
      %p166 = por %p164, %p165
      %p167 = scmp.le.s32.totalorder 1, %s13
      %p168 = scmp.lt.s32.totalorder %s13, 5
      %p169 = pnand %p167, %p168
      %p170 = pneg %p169
      // Predicated region
      $region9: #{tpu_custom_call.1} parent=5 // pred_check
        _
      $region10: #{tpu_custom_call.1} parent=5 // pred_check_branch
        %172 = sbr.rel (%p169) target = $region12
      $region11: #{tpu_custom_call.1} parent=5 // pred_region
        %s173 = ssub.s32 %s13, 1
      $region12: #{tpu_custom_call.1} parent=5 // pred_fallthru
        _
      %p174 = scmp.lt.s32.totalorder %s13, 4
      // Predicated region
      $region13: #{tpu_custom_call.1} parent=5 // pred_check
        %p175 = pneg %p174
      $region14: #{tpu_custom_call.1} parent=5 // pred_check_branch
        %177 = sbr.rel (%p175) target = $region16
      $region15: #{tpu_custom_call.1} parent=5 // pred_region
        // Predicated region
        $region17: #{tpu_custom_call.1} parent=15 // pred_check
          %p178 = pneg %p45
        $region18: #{tpu_custom_call.1} parent=15 // pred_check_branch
          %180 = sbr.rel (%p178) target = $region20
        $region19: #{tpu_custom_call.1} parent=15 // pred_region
          %p181 = scmp.lt.s32.totalorder %s20, 1
          %s182 = scalar_select %p181, %s20, 1
          %s183 = smul.addr %s182, 4
          %s184 = smul.addr %s183, 4
          %s185 = scalar_lea.vmem %s0, %s184
        $region20: #{tpu_custom_call.1} parent=15 // pred_fallthru
          _
        // Predicated region
        $region21: #{tpu_custom_call.1} parent=15 // pred_check
          %p186 = pneg %p71
        $region22: #{tpu_custom_call.1} parent=15 // pred_check_branch
          %188 = sbr.rel (%p186) target = $region24
        $region23: #{tpu_custom_call.1} parent=15 // pred_region
          %p189 = scmp.lt.s32.totalorder %s20, 1
          %s190 = scalar_select %p189, %s20, 1
          %s191 = smul.addr %s190, 2
          %s192 = scalar_lea.vmem %s1, %s191
        $region24: #{tpu_custom_call.1} parent=15 // pred_fallthru
          _
        // Predicated region
        $region25: #{tpu_custom_call.1} parent=15 // pred_check
          %p193 = pneg %p99
        $region26: #{tpu_custom_call.1} parent=15 // pred_check_branch
          %195 = sbr.rel (%p193) target = $region28
        $region27: #{tpu_custom_call.1} parent=15 // pred_region
          %s196 = smul.u32 2, %s21
          %p197 = scmp.lt.s32.totalorder %s20, 1
          %s198 = scalar_select %p197, %s20, 1
          %p199 = scmp.lt.s32.totalorder %s196, 3
          %s200 = scalar_select %p199, %s196, 3
          %s201 = smul.addr %s198, 4
          %s202 = sadd.s32 %s200, %s201
          %s203 = smul.addr %s202, 8
          %s204 = scalar_lea.vmem %s2, %s203
          %s205 = smul.u32 2, %s21
        $region28: #{tpu_custom_call.1} parent=15 // pred_fallthru
          _
        // Predicated region
        $region29: #{tpu_custom_call.1} parent=15 // pred_check
          %p206 = pneg %p125
        $region30: #{tpu_custom_call.1} parent=15 // pred_check_branch
          %208 = sbr.rel (%p206) target = $region32
        $region31: #{tpu_custom_call.1} parent=15 // pred_region
          %s209 = smul.u32 2, %s21
          %p210 = scmp.lt.s32.totalorder %s209, 3
          %s211 = scalar_select %p210, %s209, 3
          %s212 = smul.addr %s211, 4
          %s213 = scalar_lea.vmem %s3, %s212
          %s214 = smul.u32 2, %s21
        $region32: #{tpu_custom_call.1} parent=15 // pred_fallthru
          _
      $region16: #{tpu_custom_call.1} parent=5 // pred_fallthru
        _
      %p215 = scmp.le.s32.totalorder 1, %s13
      %p216 = scmp.lt.s32.totalorder %s13, 5
      %p217 = pnand %p215, %p216
      %p218 = pneg %p217
      // Predicated region
      $region33: #{tpu_custom_call.1} parent=5 // pred_check
        _
      $region34: #{tpu_custom_call.1} parent=5 // pred_check_branch
        %220 = sbr.rel (%p217) target = $region36
      $region35: #{tpu_custom_call.1} parent=5 // pred_region
        %s221 = ssub.s32 %s13, 1
        %p222 = scmp.lt.s32.totalorder %s22, 1
        %s223 = scalar_select %p222, %s22, 1
        %s224 = smul.addr %s223, 4
        %s225 = smul.addr %s224, 4
        %s226 = scalar_lea.vmem %s0, %s225
        %p227 = pneg %p51
        %p228 = pneg %p48
        %p229 = scmp.lt.s32.totalorder %s22, 1
        %s230 = scalar_select %p229, %s22, 1
        %s231 = smul.addr %s230, 2
        %s232 = scalar_lea.vmem %s1, %s231
        %p233 = pneg %p77
        %p234 = pneg %p74
        %s235 = smul.u32 2, %s23
        %p236 = scmp.lt.s32.totalorder %s22, 1
        %s237 = scalar_select %p236, %s22, 1
        %p238 = scmp.lt.s32.totalorder %s235, 3
        %s239 = scalar_select %p238, %s235, 3
        %s240 = smul.addr %s237, 4
        %s241 = sadd.s32 %s239, %s240
        %s242 = smul.addr %s241, 8
        %s243 = scalar_lea.vmem %s2, %s242
        %p244 = pneg %p105
        %p245 = pneg %p102
        %s246 = smul.u32 2, %s23
        %p247 = scmp.lt.s32.totalorder %s246, 3
        %s248 = scalar_select %p247, %s246, 3
        %s249 = smul.addr %s248, 4
        %s250 = scalar_lea.vmem %s3, %s249
        %p251 = pneg %p131
        %p252 = pneg %p128
        %p253 = pneg %p159
        %p254 = pneg %p156
        %s255 = sand.u32 %s146, 1
        %s256 = scalar_lea.sflag [#allocation3], %s255
        %s257 = sand.u32 %s146, 1
        %s258 = smul.addr %s257, 16
        %s259 = scalar_lea.vmem [#allocation2], %s258
        %p260 = scmp.lt.s32.totalorder %s22, 1
        %s261 = scalar_select %p260, %s22, 1
        %s262 = smul.addr %s261, 4
        %s263 = smul.addr %s262, 4
        %s264 = scalar_lea.vmem %s0, %s263
        %p265 = scmp.lt.s32.totalorder %s22, 1
        %s266 = scalar_select %p265, %s22, 1
        %s267 = smul.addr %s266, 2
        %s268 = scalar_lea.vmem %s1, %s267
        %s269 = smul.u32 2, %s23
        %p270 = scmp.lt.s32.totalorder %s22, 1
        %s271 = scalar_select %p270, %s22, 1
        %p272 = scmp.lt.s32.totalorder %s269, 3
        %s273 = scalar_select %p272, %s269, 3
        %s274 = smul.addr %s271, 4
        %s275 = sadd.s32 %s273, %s274
        %s276 = smul.addr %s275, 8
        %s277 = scalar_lea.vmem %s2, %s276
        %s278 = smul.u32 2, %s23
        %s279 = smul.u32 2, %s23
        %p280 = scmp.lt.s32.totalorder %s279, 3
        %s281 = scalar_select %p280, %s279, 3
        %s282 = smul.addr %s281, 4
        %s283 = scalar_lea.vmem %s3, %s282
        %s284 = smul.u32 2, %s23
        %s285 = smul.u32 2, %s23
        %v287 = vld [vmem:[%s264] sm:$0xf]
        %v288 = vld [vmem:[%s264 + $0x4] sm:$0xf]
        %v289 = vld [vmem:[%s264 + $0x8] sm:$0xf]
        %v290 = vld [vmem:[%s264 + $0xc] sm:$0xf]
        %v291 = vld [vmem:[%s268] sm:$0x3]
        %v292 = vld [vmem:[%s277] sm:$0xff]
        %v293 = vld [vmem:[%s277 + $0x8] sm:$0xff]
        %v294 = vld [vmem:[%s283] sm:$0xf]
        %v295 = vld [vmem:[%s283 + $0x4] sm:$0xf]
        %v296 = vunpack.c.l.bf16 %v294
        %v297 = vunpack.c.l.bf16 %v295
        %299 = vset.pattern.permute.xlu0 0
        %300 = vperm.xlu0 %299, %v292
        %v301 = vpop.permute.xlu0 %300
        %304 = vset.pattern.permute.xlu0 0
        %305 = vperm.xlu0 %304, %v293
        %v306 = vpop.permute.xlu0 %305
        %v308 = vlaneseq
        %v309 = vshrl.u32 %v308, 7
        %v310 = vsub.s32 0, %v309
        %v311 = vrot.slane %v291, %v310
        %v312 = vadd.f32 %v301, %v311
        %v313 = vadd.f32 %v306, %v311
        %v314 = vmul.f32 %v312, 0.2
        %v315 = vmul.f32 %v313, 0.2
        %v316 = vmax.f32 %v312, %v314
        %v317 = vmax.f32 %v313, %v315
        %v318 = vadd.f32 %v316, %v296
        %v319 = vadd.f32 %v317, %v297
        %vm320 = vcmask 261120
        %v321 = vsel %vm320, %v318, -inf
        %322 = vmax.xlane.f32.xlu0 %v321
        %v323 = vpop.xlane.xlu0 %322
        %v324 = vsel %vm320, %v319, -inf
        %325 = vmax.xlane.f32.xlu0 %v324
        %v326 = vpop.xlane.xlu0 %325
        %v327 = vsub.f32 %v318, %v323
        %v328 = vsub.f32 %v319, %v326
        %v329 = vmul.f32 %v327, 1.442695
        %v330 = vpow.pop %v329
        %v331 = vmul.f32 %v328, 1.442695
        %v332 = vpow.pop %v331
        %v333 = vsel %vm320, %v330, 0.0
        %334 = vadd.xlane.f32.xlu0 %v333
        %v335 = vpop.xlane.xlu0 %334
        %v336 = vsel %vm320, %v332, 0.0
        %337 = vadd.xlane.f32.xlu0 %v336
        %v338 = vpop.xlane.xlu0 %337
        %v339 = vpack.c.bf16 %v332, %v330
        %v344 = vunpack.c.l.b16 %v287
        %v345 = vunpack.c.l.b16 %v288
        %v346 = vunpack.c.l.b16 %v289
        %v347 = vunpack.c.l.b16 %v290
        %v348 = vpack.c.b16 %v345, %v344
        %v349 = vpack.c.b16 %v347, %v346
        %v353 = vsel %vm320, %v339, 0
        %355 = vmatprep.subr.bf16.mxu0 0
        %356 = vmatpush1.bf16.msra.mxu0 0
        %357 = vmatprep.subr.bf16.mxu0 0
        %358 = vmatpush1.bf16.msra.mxu0 0
        %359 = vmatprep.subr.bf16.mxu0 0
        %360 = vmatpush1.bf16.msra.mxu0 0
        %361 = vmatprep.subr.bf16.mxu0 0
        %362 = vmatpush1.bf16.msra.mxu0 0
        %363 = vmatprep.subr.bf16.mxu0 0
        %364 = vmatpush1.bf16.msra.mxu0 0
        %365 = vmatprep.subr.bf16.mxu0 0
        %366 = vmatpush1.bf16.msra.mxu0 0
        %367 = vmatprep.subr.bf16.mxu0 0
        %368 = vmatpush1.bf16.msra.mxu0 %v349
        %369 = vmatprep.subr.bf16.mxu0 0
        %370 = vmatpush1.bf16.msra.mxu0 %v348
        %371 = vmatprep.subr.bf16.mxu0 0
        %372 = vmatpush2.bf16.msra.mxu0 0
        %373 = vmatprep.subr.bf16.mxu0 0
        %374 = vmatpush2.bf16.msra.mxu0 0
        %375 = vmatprep.subr.bf16.mxu0 0
        %376 = vmatpush2.bf16.msra.mxu0 0
        %377 = vmatprep.subr.bf16.mxu0 0
        %378 = vmatpush2.bf16.msra.mxu0 0
        %379 = vmatprep.subr.bf16.mxu0 0
        %380 = vmatpush2.bf16.msra.mxu0 0
        %381 = vmatprep.subr.bf16.mxu0 0
        %382 = vmatpush2.bf16.msra.mxu0 0
        %383 = vmatprep.subr.bf16.mxu0 0
        %384 = vmatpush2.bf16.msra.mxu0 0
        %385 = vmatprep.subr.bf16.mxu0 0
        %386 = vmatpush2.bf16.msra.mxu0 0
        %387 = vmatprep.mubr.bf16.mxu0 0
        %388 = vmatmul.mubr.bf16.gmra.mxu0 %v353
        %v389 = vpop.f32.mrf.mxu0
        %v390 = vadd.f32 0.0, %v389
        %v391 = vpop.f32.mrf.mxu0
        %v392 = vpop.f32.mrf.mxu0
        %v393 = vadd.f32 0.0, %v392
        %v394 = vpop.f32.mrf.mxu0
        %395 = vdwg.mxu0
        %v396 = vrcp.pop %v335
        %v397 = vrcp.pop %v338
        %v398 = vmul.f32 %v390, %v396
        %v399 = vmul.f32 %v393, %v397
        %v400 = vmax.f32 %v398, 0.0
        %v401 = vmax.f32 %v399, 0.0
        %vm402 = vcmask 130048
        %403 = vst.msk [vmem:[%s259] sm:$0xff] %vm402, %v400
        %404 = vst.msk [vmem:[%s259 + $0x8] sm:$0xff] %vm402, %v401
        %405 = vset.pattern.permute.xlu0 1
        %406 = vperm.xlu0 %405, %v292
        %v407 = vpop.permute.xlu0 %406
        %409 = vset.pattern.permute.xlu0 1
        %410 = vperm.xlu0 %409, %v293
        %v411 = vpop.permute.xlu0 %410
        %v413 = vlaneseq
        %v414 = vshrl.u32 %v413, 7
        %v415 = vsub.s32 1, %v414
        %v416 = vrot.slane %v291, %v415
        %v417 = vadd.f32 %v407, %v416
        %v418 = vadd.f32 %v411, %v416
        %v419 = vmul.f32 %v417, 0.2
        %v420 = vmul.f32 %v418, 0.2
        %v421 = vmax.f32 %v417, %v419
        %v422 = vmax.f32 %v418, %v420
        %v423 = vadd.f32 %v421, %v296
        %v424 = vadd.f32 %v422, %v297
        %v425 = vsel %vm320, %v423, -inf
        %426 = vmax.xlane.f32.xlu0 %v425
        %v427 = vpop.xlane.xlu0 %426
        %v428 = vsel %vm320, %v424, -inf
        %429 = vmax.xlane.f32.xlu0 %v428
        %v430 = vpop.xlane.xlu0 %429
        %v431 = vsub.f32 %v423, %v427
        %v432 = vsub.f32 %v424, %v430
        %v433 = vmul.f32 %v431, 1.442695
        %v434 = vpow.pop %v433
        %v435 = vmul.f32 %v432, 1.442695
        %v436 = vpow.pop %v435
        %v437 = vsel %vm320, %v434, 0.0
        %438 = vadd.xlane.f32.xlu0 %v437
        %v439 = vpop.xlane.xlu0 %438
        %v440 = vsel %vm320, %v436, 0.0
        %441 = vadd.xlane.f32.xlu0 %v440
        %v442 = vpop.xlane.xlu0 %441
        %v443 = vpack.c.bf16 %v436, %v434
        %444 = vrot.lane.b32.xlu0 %v348, 112
        %v445 = vpop.permute.xlu0 %444
        %446 = vrot.lane.b32.xlu0 %v349, 112
        %v447 = vpop.permute.xlu0 %446
        %v451 = vsel %vm320, %v443, 0
        %453 = vmatprep.subr.bf16.mxu0 0
        %454 = vmatpush1.bf16.msra.mxu0 0
        %455 = vmatprep.subr.bf16.mxu0 0
        %456 = vmatpush1.bf16.msra.mxu0 0
        %457 = vmatprep.subr.bf16.mxu0 0
        %458 = vmatpush1.bf16.msra.mxu0 0
        %459 = vmatprep.subr.bf16.mxu0 0
        %460 = vmatpush1.bf16.msra.mxu0 0
        %461 = vmatprep.subr.bf16.mxu0 0
        %462 = vmatpush1.bf16.msra.mxu0 0
        %463 = vmatprep.subr.bf16.mxu0 0
        %464 = vmatpush1.bf16.msra.mxu0 0
        %465 = vmatprep.subr.bf16.mxu0 0
        %466 = vmatpush1.bf16.msra.mxu0 %v447
        %467 = vmatprep.subr.bf16.mxu0 0
        %468 = vmatpush1.bf16.msra.mxu0 %v445
        %469 = vmatprep.subr.bf16.mxu0 0
        %470 = vmatpush2.bf16.msra.mxu0 0
        %471 = vmatprep.subr.bf16.mxu0 0
        %472 = vmatpush2.bf16.msra.mxu0 0
        %473 = vmatprep.subr.bf16.mxu0 0
        %474 = vmatpush2.bf16.msra.mxu0 0
        %475 = vmatprep.subr.bf16.mxu0 0
        %476 = vmatpush2.bf16.msra.mxu0 0
        %477 = vmatprep.subr.bf16.mxu0 0
        %478 = vmatpush2.bf16.msra.mxu0 0
        %479 = vmatprep.subr.bf16.mxu0 0
        %480 = vmatpush2.bf16.msra.mxu0 0
        %481 = vmatprep.subr.bf16.mxu0 0
        %482 = vmatpush2.bf16.msra.mxu0 0
        %483 = vmatprep.subr.bf16.mxu0 0
        %484 = vmatpush2.bf16.msra.mxu0 0
        %485 = vmatprep.mubr.bf16.mxu0 0
        %486 = vmatmul.mubr.bf16.gmra.mxu0 %v451
        %v487 = vpop.f32.mrf.mxu0
        %v488 = vadd.f32 0.0, %v487
        %v489 = vpop.f32.mrf.mxu0
        %v490 = vpop.f32.mrf.mxu0
        %v491 = vadd.f32 0.0, %v490
        %v492 = vpop.f32.mrf.mxu0
        %493 = vdwg.mxu0
        %v494 = vrcp.pop %v439
        %v495 = vrcp.pop %v442
        %v496 = vmul.f32 %v488, %v494
        %v497 = vmul.f32 %v491, %v495
        %v498 = vmax.f32 %v496, 0.0
        %v499 = vmax.f32 %v497, 0.0
        %502 = vrot.lane.b32.xlu0 %v498, 16
        %v503 = vpop.permute.xlu0 %502
        %504 = vrot.lane.b32.xlu0 %v499, 16
        %v505 = vpop.permute.xlu0 %504
        %vm508 = vcmask 261248
        %509 = vst.msk [vmem:[%s259] sm:$0xff] %vm508, %v503
        %510 = vst.msk [vmem:[%s259 + $0x8] sm:$0xff] %vm508, %v505
        %s511 = sand.u32 %s146, 1
        %s512 = scalar_lea.sflag [#allocation3], %s511
        %s513 = sand.u32 %s146, 1
        %s514 = smul.addr %s513, 16
        %s515 = scalar_lea.vmem [#allocation2], %s514
        // Predicated region
        $region37: #{tpu_custom_call.1} parent=35 // pred_check
          %p516 = pneg %p156
        $region38: #{tpu_custom_call.1} parent=35 // pred_check_branch
          %518 = sbr.rel (%p516) target = $region40
        $region39: #{tpu_custom_call.1} parent=35 // pred_region
          %s519 = smul.u32 2, %s23
          %s521 = ssub.s32 256, 256
          %522 = vsyncadd %s512, %s521
          %s523 = smul.addr %s22, 4
          %s524 = sadd.s32 %s519, %s523
          %s525 = smul.addr %s524, 128
          %s526 = scalar_lea.hbm %s4, %s525
          %s527 = sshll.u32 %s515, 4
          %s528 = int_to_ptr.vmem [resolvable:$true] %s527
          %533 = dma.vmem_to_hbm [thread:$0]  %s528, 256, %s526, %s512, 128, 128, 8
        $region40: #{tpu_custom_call.1} parent=35 // pred_fallthru
          _
      $region36: #{tpu_custom_call.1} parent=5 // pred_fallthru
        _
      %p534 = scmp.le.s32.totalorder 2, %s13
      // Predicated region
      $region41: #{tpu_custom_call.1} parent=5 // pred_check
        %p535 = pneg %p534
      $region42: #{tpu_custom_call.1} parent=5 // pred_check_branch
        %537 = sbr.rel (%p535) target = $region44
      $region43: #{tpu_custom_call.1} parent=5 // pred_region
        %s538 = ssub.s32 %s13, 2
        // Predicated region
        $region45: #{tpu_custom_call.1} parent=43 // pred_check
          %p539 = pneg %p162
        $region46: #{tpu_custom_call.1} parent=43 // pred_check_branch
          %541 = sbr.rel (%p539) target = $region48
        $region47: #{tpu_custom_call.1} parent=43 // pred_region
          %s542 = sand.u32 %s147, 1
          %s543 = scalar_lea.sflag [#allocation3], %s542
          %s544 = sand.u32 %s147, 1
          %s545 = smul.addr %s544, 16
          %s546 = scalar_lea.vmem [#allocation2], %s545
          %547 = dma.done %s543, 256
        $region48: #{tpu_custom_call.1} parent=43 // pred_fallthru
          _
      $region44: #{tpu_custom_call.1} parent=5 // pred_fallthru
        _
    $region6: #{tpu_custom_call.1} parent=1 // loop_footer
      %s17 = sadd.s32 1, %s13
    $region7: #{tpu_custom_call.1} parent=1 // loop_footer_branch
      %12 = sbr.rel target = $region3
    $region8: #{tpu_custom_call.1} parent=1 // loop_exit
      _
    %548 = vsyncpa [#allocation3], 1
    %s549 = scalar_lea.sflag [#allocation3], 1
    %550 = vsyncpa %s549, 1

</llo_original>
